<compile_context>
chip_gen: v7x
topology: tpu7x:2x2x1
jax: 0.10.0
libtpu: 0.0.40
codegen_flags: <defaults>
</compile_context>

<pallas_src>
import functools

import jax
import jax.numpy as jnp
from jax.experimental import pallas as pl
from jax.experimental.pallas import tpu as pltpu


def _fused_encoder_kernel(*refs, num_mlp_layers: int):
    """refs layout: x, (w1, b1), ..., (wn, bn), (w_means, b_means), out."""
    x_ref = refs[0]
    out_ref = refs[-1]
    wb = refs[1:-1]

    h = x_ref[...]
    # Hidden MLP layers: Linear + ReLU.  Activations never leave the chip.
    for i in range(num_mlp_layers):
        w = wb[2 * i][...]          # (IN_i, OUT_i)
        b = wb[2 * i + 1][...]      # (1, OUT_i)
        h = jnp.maximum(
            jnp.dot(h, w, preferred_element_type=jnp.float32) + b, 0.0)

    # Final linear_means (no activation).
    w_m = wb[2 * num_mlp_layers][...]
    b_m = wb[2 * num_mlp_layers + 1][...]
    y = jnp.dot(h, w_m, preferred_element_type=jnp.float32) + b_m
    out_ref[...] = y.astype(out_ref.dtype)


def encoder_forward(params, x):
    """Pallas-backed Encoder.forward — one fused pallas_call for the whole net."""
    mlp = params["mlp"]
    w_m, b_m = params["means"]
    num_mlp_layers = len(mlp)

    operands = [x]
    for w, b in mlp:
        operands.append(w)                 # (in, out), pre-transposed
        operands.append(b.reshape(1, -1))  # keep biases 2-D for clean layout
    operands.append(w_m)
    operands.append(b_m.reshape(1, -1))

    B = x.shape[0]
    latent = w_m.shape[1]

    vmem_spec = pl.BlockSpec(memory_space=pltpu.MemorySpace.VMEM)
    kernel = functools.partial(_fused_encoder_kernel,
                               num_mlp_layers=num_mlp_layers)

    return pl.pallas_call(
        kernel,
        out_shape=jax.ShapeDtypeStruct((B, latent), x.dtype),
        in_specs=[vmem_spec] * len(operands),
        out_specs=vmem_spec,
    )(*operands)


def init_encoder_params(key, layer_sizes, latent_size):
    """Deterministic synthetic parameters matching the PyTorch module shapes.

    Weights are stored already transposed to (in, out)."""
    params = {"mlp": [], "means": None, "log_var": None}
    keys = jax.random.split(key, 2 * (len(layer_sizes) - 1) + 4)
    k = 0
    for in_size, out_size in zip(layer_sizes[:-1], layer_sizes[1:]):
        w = jax.random.normal(keys[k], (in_size, out_size), jnp.float32) * 0.05
        bias = jax.random.normal(keys[k + 1], (out_size,), jnp.float32) * 0.01
        params["mlp"].append((w, bias))
        k += 2
    w_m = jax.random.normal(keys[k], (layer_sizes[-1], latent_size), jnp.float32) * 0.05
    b_m = jax.random.normal(keys[k + 1], (latent_size,), jnp.float32) * 0.01
    params["means"] = (w_m, b_m)
    # linear_log_var exists in __init__ but is unused in forward; keep for parity.
    w_v = jax.random.normal(keys[k + 2], (layer_sizes[-1], latent_size), jnp.float32) * 0.05
    b_v = jax.random.normal(keys[k + 3], (latent_size,), jnp.float32) * 0.01
    params["log_var"] = (w_v, b_v)
    return params


def encoder_forward_ref(params, x):
    """Pure-JAX reference for correctness checking."""
    h = x
    for w, b in params["mlp"]:
        h = jnp.maximum(h @ w + b, 0.0)
    w_m, b_m = params["means"]
    return h @ w_m + b_m


if __name__ == "__main__":
    layer_sizes = [32, 64, 64]   # MLP: 32->64 (ReLU), 64->64 (ReLU)
    latent_size = 16             # linear_means: 64->16
    batch = 8

    key = jax.random.PRNGKey(0)
    k_params, k_x = jax.random.split(key)
    params = init_encoder_params(k_params, layer_sizes, latent_size)
    x = jax.random.normal(k_x, (batch, layer_sizes[0]), jnp.float32)

    means = jax.jit(encoder_forward)(params, x)
    jax.block_until_ready(means)

    ref = encoder_forward_ref(params, x)
    assert means.shape == (batch, latent_size)
    assert jnp.allclose(means, ref, atol=1e-5, rtol=1e-5), "mismatch vs reference"

    print("KERNEL_OK")
</pallas_src>

<mosaic_0001>
module attributes {stable_mosaic.version = 11 : i64} {
  func.func @_fused_encoder_kernel(%arg0: memref<8x32xf32, #tpu.memory_space<vmem>>, %arg1: memref<32x64xf32, #tpu.memory_space<vmem>>, %arg2: memref<1x64xf32, #tpu.memory_space<vmem>>, %arg3: memref<64x64xf32, #tpu.memory_space<vmem>>, %arg4: memref<1x64xf32, #tpu.memory_space<vmem>>, %arg5: memref<64x16xf32, #tpu.memory_space<vmem>>, %arg6: memref<1x16xf32, #tpu.memory_space<vmem>>, %arg7: memref<8x16xf32, #tpu.memory_space<vmem>>) attributes {dimension_semantics = [], scalar_prefetch = 0 : i64, scratch_operands = 0 : i64, tpu.core_type = #tpu.core_type<tc>} {
    %c0 = arith.constant 0 : index
    %c0_0 = arith.constant 0 : index
    %0 = vector.load %arg0[%c0, %c0_0] : memref<8x32xf32, #tpu.memory_space<vmem>>, vector<8x32xf32>
    %c0_1 = arith.constant 0 : index
    %c0_2 = arith.constant 0 : index
    %1 = vector.load %arg1[%c0_1, %c0_2] : memref<32x64xf32, #tpu.memory_space<vmem>>, vector<32x64xf32>
    %c0_3 = arith.constant 0 : index
    %c0_4 = arith.constant 0 : index
    %2 = vector.load %arg2[%c0_3, %c0_4] : memref<1x64xf32, #tpu.memory_space<vmem>>, vector<1x64xf32>
    %cst = arith.constant dense<0.000000e+00> : vector<8x64xf32>
    %3 = tpu.matmul %0, %1, %cst {dimension_numbers = #tpu.dot_dimension_numbers<[1], [0], [0], [1], [0, 0, 1, 1], [], []>} : vector<8x32xf32>, vector<32x64xf32>, vector<8x64xf32> -> vector<8x64xf32>
    %4 = vector.broadcast %2 : vector<1x64xf32> to vector<8x64xf32>
    %5 = arith.addf %3, %4 : vector<8x64xf32>
    %cst_5 = arith.constant 0.000000e+00 : f32
    %6 = vector.broadcast %cst_5 : f32 to vector<8x64xf32>
    %7 = arith.maximumf %5, %6 : vector<8x64xf32>
    %c0_6 = arith.constant 0 : index
    %c0_7 = arith.constant 0 : index
    %8 = vector.load %arg3[%c0_6, %c0_7] : memref<64x64xf32, #tpu.memory_space<vmem>>, vector<64x64xf32>
    %c0_8 = arith.constant 0 : index
    %c0_9 = arith.constant 0 : index
    %9 = vector.load %arg4[%c0_8, %c0_9] : memref<1x64xf32, #tpu.memory_space<vmem>>, vector<1x64xf32>
    %cst_10 = arith.constant dense<0.000000e+00> : vector<8x64xf32>
    %10 = tpu.matmul %7, %8, %cst_10 {dimension_numbers = #tpu.dot_dimension_numbers<[1], [0], [0], [1], [0, 0, 1, 1], [], []>} : vector<8x64xf32>, vector<64x64xf32>, vector<8x64xf32> -> vector<8x64xf32>
    %11 = vector.broadcast %9 : vector<1x64xf32> to vector<8x64xf32>
    %12 = arith.addf %10, %11 : vector<8x64xf32>
    %cst_11 = arith.constant 0.000000e+00 : f32
    %13 = vector.broadcast %cst_11 : f32 to vector<8x64xf32>
    %14 = arith.maximumf %12, %13 : vector<8x64xf32>
    %c0_12 = arith.constant 0 : index
    %c0_13 = arith.constant 0 : index
    %15 = vector.load %arg5[%c0_12, %c0_13] : memref<64x16xf32, #tpu.memory_space<vmem>>, vector<64x16xf32>
    %c0_14 = arith.constant 0 : index
    %c0_15 = arith.constant 0 : index
    %16 = vector.load %arg6[%c0_14, %c0_15] : memref<1x16xf32, #tpu.memory_space<vmem>>, vector<1x16xf32>
    %cst_16 = arith.constant dense<0.000000e+00> : vector<8x16xf32>
    %17 = tpu.matmul %14, %15, %cst_16 {dimension_numbers = #tpu.dot_dimension_numbers<[1], [0], [0], [1], [0, 0, 1, 1], [], []>} : vector<8x64xf32>, vector<64x16xf32>, vector<8x16xf32> -> vector<8x16xf32>
    %18 = vector.broadcast %16 : vector<1x16xf32> to vector<8x16xf32>
    %19 = arith.addf %17, %18 : vector<8x16xf32>
    %c0_17 = arith.constant 0 : index
    %c0_18 = arith.constant 0 : index
    %20 = vector.load %arg7[%c0_17, %c0_18] : memref<8x16xf32, #tpu.memory_space<vmem>>, vector<8x16xf32>
    tpu.vector_store %arg7[%c0_17, %c0_18], %19 {strides = array<i32>} : memref<8x16xf32, #tpu.memory_space<vmem>>, vector<8x16xf32>,
    return
  }
}

</mosaic_0001>

<llo_original>
// kernel: encoder_forward.1
$region0: #{encoder_forward.1}
  #allocation0 [shape = 'u32[]', space=smem, size = 0x4, offset = 0x4, fixed_abs, tag = 'smem constant byte address 0x4 - core index']
  #allocation1 [shape = 'u32[144,128]{1,0:T(1,128)}', space=vmem, size = 0x12000, scoped, tag = 'internal scratch']
  %s0 = inlined_call_operand.vmem [shape: f32[8,32], index: 0, kind: input, shape index: {}]
  %s1 = inlined_call_operand.vmem [shape: f32[32,64], index: 1, kind: input, shape index: {}]
  %s2 = inlined_call_operand.vmem [shape: f32[1,64], index: 2, kind: input, shape index: {}]
  %s3 = inlined_call_operand.vmem [shape: f32[64,64], index: 3, kind: input, shape index: {}]
  %s4 = inlined_call_operand.vmem [shape: f32[1,64], index: 4, kind: input, shape index: {}]
  %s5 = inlined_call_operand.vmem [shape: f32[64,16], index: 5, kind: input, shape index: {}]
  %s6 = inlined_call_operand.hbm [shape: f32[1,16], index: 6, kind: input, shape index: {}]
  %s7 = inlined_call_operand.hbm [shape: f32[8,16], index: 7, kind: output, shape index: {}]
  %s8 = sld [smem:[#allocation0]]
  $region42: #{encoder_forward.1} parent=0
    _
  %s10 = ssub.s32 1, %s8
  %s11 = scalar_select 0, %s10, %s8
  $region1: #{encoder_forward.1} parent=0
    #allocation2 [shape = 'u8[512]{0}', space=vmem, size = 0x400, scoped, tag = 'input window, operand 6, single buffered']
    #allocation3 [shape = 's32[1]{0}', space=sflag, size = 0x4, scoped, tag = 'scoped memory for encoder_forward.1']
    #allocation4 [shape = 's32[1]{0}', space=sflag, size = 0x4, scoped, tag = 'scoped memory for encoder_forward.1']
    #allocation5 [shape = 'u8[4096]{0}', space=vmem, size = 0x1000, scoped, tag = 'output window, operand 0, single buffered']
    %12 = vsyncpa [#allocation3], 0
    %13 = vsyncpa [#allocation4], 0
    // Predicated region
    $region2: #{encoder_forward.1} parent=1 // pred_check
      _
    $region3: #{encoder_forward.1} parent=1 // pred_check_branch
      %15 = sbr.rel (0) target = $region5
    $region4: #{encoder_forward.1} parent=1 // pred_region
      _
    $region5: #{encoder_forward.1} parent=1 // pred_fallthru
      _
    // Predicated region
    $region6: #{encoder_forward.1} parent=1 // pred_check
      _
    $region7: #{encoder_forward.1} parent=1 // pred_check_branch
      %17 = sbr.rel (0) target = $region9
    $region8: #{encoder_forward.1} parent=1 // pred_region
      _
    $region9: #{encoder_forward.1} parent=1 // pred_fallthru
      _
    // Predicated region
    $region10: #{encoder_forward.1} parent=1 // pred_check
      _
    $region11: #{encoder_forward.1} parent=1 // pred_check_branch
      %19 = sbr.rel (0) target = $region13
    $region12: #{encoder_forward.1} parent=1 // pred_region
      _
    $region13: #{encoder_forward.1} parent=1 // pred_fallthru
      _
    // Predicated region
    $region14: #{encoder_forward.1} parent=1 // pred_check
      _
    $region15: #{encoder_forward.1} parent=1 // pred_check_branch
      %21 = sbr.rel (0) target = $region17
    $region16: #{encoder_forward.1} parent=1 // pred_region
      _
    $region17: #{encoder_forward.1} parent=1 // pred_fallthru
      _
    // Predicated region
    $region18: #{encoder_forward.1} parent=1 // pred_check
      _
    $region19: #{encoder_forward.1} parent=1 // pred_check_branch
      %23 = sbr.rel (0) target = $region21
    $region20: #{encoder_forward.1} parent=1 // pred_region
      _
    $region21: #{encoder_forward.1} parent=1 // pred_fallthru
      _
    // Predicated region
    $region22: #{encoder_forward.1} parent=1 // pred_check
      _
    $region23: #{encoder_forward.1} parent=1 // pred_check_branch
      %25 = sbr.rel (0) target = $region25
    $region24: #{encoder_forward.1} parent=1 // pred_region
      _
    $region25: #{encoder_forward.1} parent=1 // pred_fallthru
      _
    // Predicated region
    $region26: #{encoder_forward.1} parent=1 // pred_check
      _
    $region27: #{encoder_forward.1} parent=1 // pred_check_branch
      %27 = sbr.rel (0) target = $region29
    $region28: #{encoder_forward.1} parent=1 // pred_region
      %s29 = ssub.s32 16, 16
      %30 = vsyncadd [#allocation3], %s29
      %s32 = sshll.u32 [#allocation2], 4
      %s33 = int_to_ptr.vmem [resolvable:$true] %s32
      %35 = dma.hbm_to_vmem [thread:$0]  %s6, 16, %s33, [#allocation3]
    $region29: #{encoder_forward.1} parent=1 // pred_fallthru
      _
    // Predicated region
    $region30: #{encoder_forward.1} parent=1 // pred_check
      _
    $region31: #{encoder_forward.1} parent=1 // pred_check_branch
      %37 = sbr.rel (0) target = $region33
    $region32: #{encoder_forward.1} parent=1 // pred_region
      %38 = dma.done [#allocation3], 16
    $region33: #{encoder_forward.1} parent=1 // pred_fallthru
      _
    %v39 = vld [vmem:[%s0] sm:$0xff]
    %v40 = vld [vmem:[%s1] sm:$0xff]
    %v41 = vld [vmem:[%s1 + $0x8] sm:$0xff]
    %v42 = vld [vmem:[%s1 + $0x10] sm:$0xff]
    %v43 = vld [vmem:[%s1 + $0x18] sm:$0xff]
    %v44 = vld [vmem:[%s2] sm:$0x1]
    %v46 = vlaneseq
    %v47 = vshrl.u32 %v46, 7
    %v48 = vsub.s32 0, %v47
    %v49 = vrot.slane %v44, %v48
    %vm51 = vcmask 261120
    %v53 = vsel %vm51, %v39, 0
    %55 = vmatprep.subr.mxu0 0.0
    %56 = vmatpush1.msra.mxu0 %v40
    %57 = vmatprep.subr.mxu0 0.0
    %58 = vmatpush1.msra.mxu0 %v41
    %59 = vmatprep.subr.mxu0 0.0
    %60 = vmatpush1.msra.mxu0 %v42
    %61 = vmatprep.subr.mxu0 0.0
    %62 = vmatpush1.msra.mxu0 %v43
    %63 = vmatprep.subr.mxu0 0.0
    %64 = vmatpush1.msra.mxu0 0.0
    %65 = vmatprep.subr.mxu0 0.0
    %66 = vmatpush1.msra.mxu0 0.0
    %67 = vmatprep.subr.mxu0 0.0
    %68 = vmatpush1.msra.mxu0 0.0
    %69 = vmatprep.subr.mxu0 0.0
    %70 = vmatpush1.msra.mxu0 0.0
    %71 = vmatprep.subr.mxu0 0.0
    %72 = vmatpush1.msra.mxu0 0.0
    %73 = vmatprep.subr.mxu0 0.0
    %74 = vmatpush1.msra.mxu0 0.0
    %75 = vmatprep.subr.mxu0 0.0
    %76 = vmatpush1.msra.mxu0 0.0
    %77 = vmatprep.subr.mxu0 0.0
    %78 = vmatpush1.msra.mxu0 0.0
    %79 = vmatprep.subr.mxu0 0.0
    %80 = vmatpush1.msra.mxu0 0.0
    %81 = vmatprep.subr.mxu0 0.0
    %82 = vmatpush1.msra.mxu0 0.0
    %83 = vmatprep.subr.mxu0 0.0
    %84 = vmatpush1.msra.mxu0 0.0
    %85 = vmatprep.subr.mxu0 0.0
    %86 = vmatpush1.msra.mxu0 0.0
    %87 = vmatprep.subr.mxu0 0.0
    %88 = vmatpush1.msra.mxu0 0.0
    %89 = vmatprep.subr.mxu0 0.0
    %90 = vmatpush1.msra.mxu0 0.0
    %91 = vmatprep.subr.mxu0 0.0
    %92 = vmatpush1.msra.mxu0 0.0
    %93 = vmatprep.subr.mxu0 0.0
    %94 = vmatpush1.msra.mxu0 0.0
    %95 = vmatprep.subr.mxu0 0.0
    %96 = vmatpush1.msra.mxu0 0.0
    %97 = vmatprep.subr.mxu0 0.0
    %98 = vmatpush1.msra.mxu0 0.0
    %99 = vmatprep.subr.mxu0 0.0
    %100 = vmatpush1.msra.mxu0 0.0
    %101 = vmatprep.subr.mxu0 0.0
    %102 = vmatpush1.msra.mxu0 0.0
    %103 = vmatprep.subr.mxu0 0.0
    %104 = vmatpush1.msra.mxu0 0.0
    %105 = vmatprep.subr.mxu0 0.0
    %106 = vmatpush1.msra.mxu0 0.0
    %107 = vmatprep.subr.mxu0 0.0
    %108 = vmatpush1.msra.mxu0 0.0
    %109 = vmatprep.subr.mxu0 0.0
    %110 = vmatpush1.msra.mxu0 0.0
    %111 = vmatprep.subr.mxu0 0.0
    %112 = vmatpush1.msra.mxu0 0.0
    %113 = vmatprep.subr.mxu0 0.0
    %114 = vmatpush1.msra.mxu0 0.0
    %115 = vmatprep.subr.mxu0 0.0
    %116 = vmatpush1.msra.mxu0 0.0
    %117 = vmatprep.subr.mxu0 0.0
    %118 = vmatpush1.msra.mxu0 0.0
    %119 = vmatprep.mubr.f32.mxu0 0.0
    %120 = vmatmul.mubr.f32.gmra.mrb[0].mxu0 %v53
    %v121 = vpop.f32.mrb[0].mxu0
    %v122 = vadd.f32 %v49, %v121
    %v123 = vpop.f32.mrb[0].mxu0
    %124 = vdwg.mxu0
    %v125 = vmax.f32 %v122, 0.0
    %v126 = vld [vmem:[%s3] sm:$0xff]
    %v127 = vld [vmem:[%s3 + $0x8] sm:$0xff]
    %v128 = vld [vmem:[%s3 + $0x10] sm:$0xff]
    %v129 = vld [vmem:[%s3 + $0x18] sm:$0xff]
    %v130 = vld [vmem:[%s3 + $0x20] sm:$0xff]
    %v131 = vld [vmem:[%s3 + $0x28] sm:$0xff]
    %v132 = vld [vmem:[%s3 + $0x30] sm:$0xff]
    %v133 = vld [vmem:[%s3 + $0x38] sm:$0xff]
    %v134 = vld [vmem:[%s4] sm:$0x1]
    %v136 = vlaneseq
    %v137 = vshrl.u32 %v136, 7
    %v138 = vsub.s32 0, %v137
    %v139 = vrot.slane %v134, %v138
    %vm141 = vcmask 523264
    %v143 = vsel %vm141, %v125, 0
    %145 = vmatprep.subr.mxu0 0.0
    %146 = vmatpush1.msra.mxu0 %v126
    %147 = vmatprep.subr.mxu0 0.0
    %148 = vmatpush1.msra.mxu0 %v127
    %149 = vmatprep.subr.mxu0 0.0
    %150 = vmatpush1.msra.mxu0 %v128
    %151 = vmatprep.subr.mxu0 0.0
    %152 = vmatpush1.msra.mxu0 %v129
    %153 = vmatprep.subr.mxu0 0.0
    %154 = vmatpush1.msra.mxu0 %v130
    %155 = vmatprep.subr.mxu0 0.0
    %156 = vmatpush1.msra.mxu0 %v131
    %157 = vmatprep.subr.mxu0 0.0
    %158 = vmatpush1.msra.mxu0 %v132
    %159 = vmatprep.subr.mxu0 0.0
    %160 = vmatpush1.msra.mxu0 %v133
    %161 = vmatprep.subr.mxu0 0.0
    %162 = vmatpush1.msra.mxu0 0.0
    %163 = vmatprep.subr.mxu0 0.0
    %164 = vmatpush1.msra.mxu0 0.0
    %165 = vmatprep.subr.mxu0 0.0
    %166 = vmatpush1.msra.mxu0 0.0
    %167 = vmatprep.subr.mxu0 0.0
    %168 = vmatpush1.msra.mxu0 0.0
    %169 = vmatprep.subr.mxu0 0.0
    %170 = vmatpush1.msra.mxu0 0.0
    %171 = vmatprep.subr.mxu0 0.0
    %172 = vmatpush1.msra.mxu0 0.0
    %173 = vmatprep.subr.mxu0 0.0
    %174 = vmatpush1.msra.mxu0 0.0
    %175 = vmatprep.subr.mxu0 0.0
    %176 = vmatpush1.msra.mxu0 0.0
    %177 = vmatprep.subr.mxu0 0.0
    %178 = vmatpush1.msra.mxu0 0.0
    %179 = vmatprep.subr.mxu0 0.0
    %180 = vmatpush1.msra.mxu0 0.0
    %181 = vmatprep.subr.mxu0 0.0
    %182 = vmatpush1.msra.mxu0 0.0
    %183 = vmatprep.subr.mxu0 0.0
    %184 = vmatpush1.msra.mxu0 0.0
    %185 = vmatprep.subr.mxu0 0.0
    %186 = vmatpush1.msra.mxu0 0.0
    %187 = vmatprep.subr.mxu0 0.0
    %188 = vmatpush1.msra.mxu0 0.0
    %189 = vmatprep.subr.mxu0 0.0
    %190 = vmatpush1.msra.mxu0 0.0
    %191 = vmatprep.subr.mxu0 0.0
    %192 = vmatpush1.msra.mxu0 0.0
    %193 = vmatprep.subr.mxu0 0.0
    %194 = vmatpush1.msra.mxu0 0.0
    %195 = vmatprep.subr.mxu0 0.0
    %196 = vmatpush1.msra.mxu0 0.0
    %197 = vmatprep.subr.mxu0 0.0
    %198 = vmatpush1.msra.mxu0 0.0
    %199 = vmatprep.subr.mxu0 0.0
    %200 = vmatpush1.msra.mxu0 0.0
    %201 = vmatprep.subr.mxu0 0.0
    %202 = vmatpush1.msra.mxu0 0.0
    %203 = vmatprep.subr.mxu0 0.0
    %204 = vmatpush1.msra.mxu0 0.0
    %205 = vmatprep.subr.mxu0 0.0
    %206 = vmatpush1.msra.mxu0 0.0
    %207 = vmatprep.subr.mxu0 0.0
    %208 = vmatpush1.msra.mxu0 0.0
    %209 = vmatprep.mubr.f32.mxu0 0.0
    %210 = vmatmul.mubr.f32.gmra.mrb[0].mxu0 %v143
    %v211 = vpop.f32.mrb[0].mxu0
    %v212 = vadd.f32 %v139, %v211
    %v213 = vpop.f32.mrb[0].mxu0
    %214 = vdwg.mxu0
    %v215 = vmax.f32 %v212, 0.0
    %v216 = vld [vmem:[%s5] sm:$0xff]
    %v217 = vld [vmem:[%s5 + $0x8] sm:$0xff]
    %v218 = vld [vmem:[%s5 + $0x10] sm:$0xff]
    %v219 = vld [vmem:[%s5 + $0x18] sm:$0xff]
    %v220 = vld [vmem:[%s5 + $0x20] sm:$0xff]
    %v221 = vld [vmem:[%s5 + $0x28] sm:$0xff]
    %v222 = vld [vmem:[%s5 + $0x30] sm:$0xff]
    %v223 = vld [vmem:[%s5 + $0x38] sm:$0xff]
    %v224 = vld [vmem:[#allocation2] sm:$0x1]
    %v226 = vlaneseq
    %v227 = vshrl.u32 %v226, 7
    %v228 = vsub.s32 0, %v227
    %v229 = vrot.slane %v224, %v228
    %v232 = vsel %vm141, %v215, 0
    %234 = vmatprep.subr.mxu0 0.0
    %235 = vmatpush1.msra.mxu0 %v216
    %236 = vmatprep.subr.mxu0 0.0
    %237 = vmatpush1.msra.mxu0 %v217
    %238 = vmatprep.subr.mxu0 0.0
    %239 = vmatpush1.msra.mxu0 %v218
    %240 = vmatprep.subr.mxu0 0.0
    %241 = vmatpush1.msra.mxu0 %v219
    %242 = vmatprep.subr.mxu0 0.0
    %243 = vmatpush1.msra.mxu0 %v220
    %244 = vmatprep.subr.mxu0 0.0
    %245 = vmatpush1.msra.mxu0 %v221
    %246 = vmatprep.subr.mxu0 0.0
    %247 = vmatpush1.msra.mxu0 %v222
    %248 = vmatprep.subr.mxu0 0.0
    %249 = vmatpush1.msra.mxu0 %v223
    %250 = vmatprep.subr.mxu0 0.0
    %251 = vmatpush1.msra.mxu0 0.0
    %252 = vmatprep.subr.mxu0 0.0
    %253 = vmatpush1.msra.mxu0 0.0
    %254 = vmatprep.subr.mxu0 0.0
    %255 = vmatpush1.msra.mxu0 0.0
    %256 = vmatprep.subr.mxu0 0.0
    %257 = vmatpush1.msra.mxu0 0.0
    %258 = vmatprep.subr.mxu0 0.0
    %259 = vmatpush1.msra.mxu0 0.0
    %260 = vmatprep.subr.mxu0 0.0
    %261 = vmatpush1.msra.mxu0 0.0
    %262 = vmatprep.subr.mxu0 0.0
    %263 = vmatpush1.msra.mxu0 0.0
    %264 = vmatprep.subr.mxu0 0.0
    %265 = vmatpush1.msra.mxu0 0.0
    %266 = vmatprep.subr.mxu0 0.0
    %267 = vmatpush1.msra.mxu0 0.0
    %268 = vmatprep.subr.mxu0 0.0
    %269 = vmatpush1.msra.mxu0 0.0
    %270 = vmatprep.subr.mxu0 0.0
    %271 = vmatpush1.msra.mxu0 0.0
    %272 = vmatprep.subr.mxu0 0.0
    %273 = vmatpush1.msra.mxu0 0.0
    %274 = vmatprep.subr.mxu0 0.0
    %275 = vmatpush1.msra.mxu0 0.0
    %276 = vmatprep.subr.mxu0 0.0
    %277 = vmatpush1.msra.mxu0 0.0
    %278 = vmatprep.subr.mxu0 0.0
    %279 = vmatpush1.msra.mxu0 0.0
    %280 = vmatprep.subr.mxu0 0.0
    %281 = vmatpush1.msra.mxu0 0.0
    %282 = vmatprep.subr.mxu0 0.0
    %283 = vmatpush1.msra.mxu0 0.0
    %284 = vmatprep.subr.mxu0 0.0
    %285 = vmatpush1.msra.mxu0 0.0
    %286 = vmatprep.subr.mxu0 0.0
    %287 = vmatpush1.msra.mxu0 0.0
    %288 = vmatprep.subr.mxu0 0.0
    %289 = vmatpush1.msra.mxu0 0.0
    %290 = vmatprep.subr.mxu0 0.0
    %291 = vmatpush1.msra.mxu0 0.0
    %292 = vmatprep.subr.mxu0 0.0
    %293 = vmatpush1.msra.mxu0 0.0
    %294 = vmatprep.subr.mxu0 0.0
    %295 = vmatpush1.msra.mxu0 0.0
    %296 = vmatprep.subr.mxu0 0.0
    %297 = vmatpush1.msra.mxu0 0.0
    %298 = vmatprep.mubr.f32.mxu0 0.0
    %299 = vmatmul.mubr.f32.gmra.mrb[0].mxu0 %v232
    %v300 = vpop.f32.mrb[0].mxu0
    %v301 = vadd.f32 %v229, %v300
    %v302 = vpop.f32.mrb[0].mxu0
    %303 = vdwg.mxu0
    %vm304 = vcmask 130048
    %305 = vst.msk [vmem:[#allocation5] sm:$0xff] %vm304, %v301
    // Predicated region
    $region34: #{encoder_forward.1} parent=1 // pred_check
      _
    $region35: #{encoder_forward.1} parent=1 // pred_check_branch
      %307 = sbr.rel (0) target = $region37
    $region36: #{encoder_forward.1} parent=1 // pred_region
      %s309 = ssub.s32 128, 128
      %310 = vsyncadd [#allocation4], %s309
      %s312 = sshll.u32 [#allocation5], 4
      %s313 = int_to_ptr.vmem [resolvable:$true] %s312
      %315 = dma.vmem_to_hbm [thread:$0]  %s313, 128, %s7, [#allocation4]
    $region37: #{encoder_forward.1} parent=1 // pred_fallthru
      _
    // Predicated region
    $region38: #{encoder_forward.1} parent=1 // pred_check
      _
    $region39: #{encoder_forward.1} parent=1 // pred_check_branch
      %317 = sbr.rel (0) target = $region41
    $region40: #{encoder_forward.1} parent=1 // pred_region
      %318 = dma.done [#allocation4], 128
    $region41: #{encoder_forward.1} parent=1 // pred_fallthru
      _
    %319 = vsyncpa [#allocation3], 1
    %320 = vsyncpa [#allocation4], 1

</llo_original>
